<compile_context>
chip_gen: v7x
topology: tpu7x:2x2x1
jax: 0.10.0
libtpu: 0.0.40
codegen_flags: <defaults>
</compile_context>

<pallas_src>
import functools

import jax
import jax.numpy as jnp
from jax import lax
from jax.experimental import pallas as pl
from jax.experimental.pallas import tpu as pltpu

_LANE = 128
_SUBLANE = 8
_SUB_ELEMS = _SUBLANE * _LANE   # 1024 elements = one f32 vreg worth
_CHUNK_SUB = 8                  # sub-blocks per inner-loop chunk (32 KiB f32 live)


def _cdiv(a, b):
    return -(-a // b)


def _round_up(a, b):
    return _cdiv(a, b) * b


def _vmem_limit_bytes():
    """Half of physical VMEM: ~64 MiB on v5e/v6e, 32 MiB on v7x."""
    try:
        cap = int(pltpu.get_tpu_info().vmem_capacity_bytes)
    except Exception:
        cap = 64 * 1024 * 1024
    return max(32 * 1024 * 1024, cap // 2)


def _plan(total_sub, itemsize, target_block_bytes, nsplit):
    """Pick (chunk, sub_per_block, eff_split, kt_per_split, total_blocks)."""
    chunk = min(_CHUNK_SUB, total_sub)
    max_spb = (total_sub // chunk) * chunk           # block never larger than array
    spb_target = max(1, target_block_bytes // (itemsize * _SUB_ELEMS))
    spb = min(max_spb, _round_up(spb_target, chunk))
    spb = max(spb, chunk)
    total_blocks = _cdiv(total_sub, spb)
    eff_split = max(1, min(nsplit, total_blocks))
    kt_per = _cdiv(total_blocks, eff_split)
    return chunk, spb, eff_split, kt_per, total_blocks


def _dice_kernel(p_ref, t_ref, tt_ref, th_ref, ts_ref, *,
                 spb, chunk, kt_per, total_sub, needs_mask):
    """Accumulate per-(sample, split) partial sums over feature tiles.

    p_ref, t_ref          : (spb, 8, 128) input tiles
    tt/th/ts refs         : (8, 128) f32 accumulators for sum(tanh(p/2)*t),
                            sum(tanh(p/2)), sum(t); resident across the
                            trailing ("arbitrary") grid axis.
    """
    c = pl.program_id(1)
    k = pl.program_id(2)

    @pl.when(k == 0)
    def _init():
        tt_ref[...] = jnp.zeros_like(tt_ref)
        th_ref[...] = jnp.zeros_like(th_ref)
        ts_ref[...] = jnp.zeros_like(ts_ref)

    n_chunks = spb // chunk
    unroll = min(n_chunks, 8)
    zero = jnp.zeros((_SUBLANE, _LANE), jnp.float32)

    def run(masked, base):
        # Hoisted once per (rare, last-block-only) masked path.
        iota = (lax.broadcasted_iota(jnp.int32, (chunk, _SUBLANE, _LANE), 0)
                if masked else None)

        def body(ci, carry):
            a_tt, a_th, a_t = carry
            start = pl.multiple_of(ci * chunk, chunk)
            p = p_ref[pl.ds(start, chunk)].astype(jnp.float32)
            t = t_ref[pl.ds(start, chunk)].astype(jnp.float32)
            if masked:
                # Select (not multiply): boundary-block padding is garbage and
                # may contain NaN/Inf.
                m = (base + start + iota) < total_sub
                p = jnp.where(m, p, 0.0)
                t = jnp.where(m, t, 0.0)
            th = jnp.tanh(0.5 * p)               # sigmoid folded: 0.5*(1+th)
            # Reduce only over the chunk axis -> stays vreg shaped (8,128);
            # pure VPU adds, no cross-lane traffic in the hot loop.
            a_tt = a_tt + jnp.sum(th * t, axis=0)
            a_th = a_th + jnp.sum(th, axis=0)
            a_t = a_t + jnp.sum(t, axis=0)
            return a_tt, a_th, a_t

        a_tt, a_th, a_t = lax.fori_loop(0, n_chunks, body, (zero, zero, zero),
                                        unroll=unroll)
        tt_ref[...] += a_tt
        th_ref[...] += a_th
        ts_ref[...] += a_t

    if needs_mask:
        base = (c * kt_per + k) * spb            # un-clamped global sub offset
        valid = total_sub - base

        @pl.when(valid >= spb)
        def _fast():
            run(False, base)

        @pl.when(valid < spb)
        def _masked():
            run(True, base)
    else:
        run(False, 0)


@functools.partial(jax.jit,
                   static_argnames=("stream_dtype", "target_block_bytes", "nsplit"))
def dice_loss(preds, targets, *, stream_dtype=None,
              target_block_bytes=4 * 1024 * 1024, nsplit=2):
    """preds, targets: (N, C, H, W) arrays. Returns scalar f32 dice loss."""
    assert preds.shape == targets.shape
    n = preds.shape[0]
    f = preds.size // n

    # Reduced-precision streaming is OPT-IN (default: native dtype, no extra
    # cast pass / no silent numerics change).
    if stream_dtype is not None:
        sd = jnp.dtype(stream_dtype)
        if jnp.dtype(preds.dtype).itemsize > sd.itemsize:
            preds = preds.astype(sd)
        if jnp.dtype(targets.dtype).itemsize > sd.itemsize:
            targets = targets.astype(sd)

    p2 = preds.reshape(n, f)
    t2 = targets.reshape(n, f)

    total_sub = _cdiv(f, _SUB_ELEMS)
    f_pad = total_sub * _SUB_ELEMS
    if f_pad != f:
        # TODO(synk): ragged feature sizes (f % 1024 != 0) still take one
        # host-side pad copy, but only to the next 1024-element boundary.
        # Zero padding is neutral here: tanh(0)=0 and t=0 contribute nothing,
        # and the finalize uses the true feature count f.
        pad = f_pad - f
        p2 = jnp.pad(p2, ((0, 0), (0, pad)))
        t2 = jnp.pad(t2, ((0, 0), (0, pad)))

    # Lane/sublane-dense view (free reshape when f % 1024 == 0).
    p4 = p2.reshape(n, total_sub, _SUBLANE, _LANE)
    t4 = t2.reshape(n, total_sub, _SUBLANE, _LANE)

    itemsize = max(jnp.dtype(p4.dtype).itemsize, jnp.dtype(t4.dtype).itemsize)
    chunk, spb, eff_split, kt_per, total_blocks = _plan(
        total_sub, itemsize, target_block_bytes, nsplit)

    # Masking needed iff some gridded block is not fully covered by real data.
    needs_mask = (total_blocks * spb != total_sub) or (eff_split * kt_per != total_blocks)
    last_block = total_blocks - 1

    def in_index(i, c, k):
        kb = c * kt_per + k
        kb = jnp.minimum(kb, last_block)   # phantom blocks clamp to the boundary block
        return (i, kb, 0, 0)

    in_spec = pl.BlockSpec((None, spb, _SUBLANE, _LANE), in_index)
    acc_spec = pl.BlockSpec((None, None, _SUBLANE, _LANE),
                            lambda i, c, k: (i, c, 0, 0))
    acc_shape = jax.ShapeDtypeStruct((n, eff_split, _SUBLANE, _LANE), jnp.float32)

    kernel = functools.partial(
        _dice_kernel, spb=spb, chunk=chunk, kt_per=kt_per,
        total_sub=total_sub, needs_mask=needs_mask)

    tt, th, ts = pl.pallas_call(
        kernel,
        out_shape=(acc_shape, acc_shape, acc_shape),
        grid_spec=pltpu.PrefetchScalarGridSpec(
            num_scalar_prefetch=0,
            grid=(n, eff_split, kt_per),
            in_specs=[in_spec, in_spec],
            out_specs=[acc_spec, acc_spec, acc_spec],
        ),
        compiler_params=pltpu.CompilerParams(
            # samples / feature-splits are independent -> parallel (both TCs on
            # v7x even when N == 1); feature tiles are a reduction with
            # resident accumulators -> arbitrary.
            dimension_semantics=("parallel", "parallel", "arbitrary"),
            vmem_limit_bytes=_vmem_limit_bytes(),
        ),
    )(p4, t4)

    # Tiny finalize in JAX: reduce the (8,128) partial-sum slabs, unfold the
    # sigmoid = 0.5*(1 + tanh(x/2)) identity, and form dice.
    tt_s = jnp.sum(tt, axis=(1, 2, 3))                    # sum tanh(p/2) * t
    th_s = jnp.sum(th, axis=(1, 2, 3))                    # sum tanh(p/2)
    ts_s = jnp.sum(ts, axis=(1, 2, 3))                    # sum t
    inter = 0.5 * (ts_s + tt_s)                           # sum sigmoid(p) * t
    psum = 0.5 * (jnp.float32(f) + th_s)                  # sum sigmoid(p)
    smooth = jnp.float32(1.0)
    dice = (2.0 * inter + smooth) / (psum + ts_s + smooth)
    return 1.0 - jnp.sum(dice) / jnp.float32(n)


def _dice_loss_ref(preds, targets):
    """Pure-JAX f32 reference mirroring the PyTorch forward."""
    n = preds.shape[0]
    p = jax.nn.sigmoid(preds.astype(jnp.float32)).reshape(n, -1)
    t = targets.astype(jnp.float32).reshape(n, -1)
    smooth = 1.0
    inter = jnp.sum(p * t, axis=1)
    dice = (2.0 * inter + smooth) / (jnp.sum(p, axis=1) + jnp.sum(t, axis=1) + smooth)
    return 1.0 - jnp.sum(dice) / n


if __name__ == "__main__":
    key = jax.random.PRNGKey(0)
    ks = jax.random.split(key, 8)

    def check(preds, targets, tol, **kw):
        loss = jax.block_until_ready(dice_loss(preds, targets, **kw))
        ref = _dice_loss_ref(preds, targets)
        assert jnp.allclose(loss, ref, rtol=tol, atol=tol), (loss, ref, kw)

    # Primary: NCHW like the PyTorch module (f = C*H*W multiple of 1024 ->
    # zero-copy path, single block, no masking).
    N, C, H, W = 2, 4, 16, 16
    preds = jax.random.normal(ks[0], (N, C, H, W), dtype=jnp.float32)
    targets = jax.random.bernoulli(ks[1], p=0.3, shape=(N, C, H, W)).astype(jnp.float32)
    check(preds, targets, 1e-4)

    # Ragged feature size (minimal host pad to the next 1024 boundary).
    preds2 = jax.random.normal(ks[2], (3, 3, 17, 23), dtype=jnp.float32)
    targets2 = jax.random.bernoulli(ks[3], p=0.4, shape=(3, 3, 17, 23)).astype(jnp.float32)
    check(preds2, targets2, 1e-4)

    # Multi-block reduction: exercises the 2-way feature split + in-kernel
    # boundary masking, and (nsplit=1) the multi-step k-accumulation path.
    preds3 = jax.random.normal(ks[4], (2, 8, 64, 48), dtype=jnp.float32)
    targets3 = jax.random.bernoulli(ks[5], p=0.25, shape=(2, 8, 64, 48)).astype(jnp.float32)
    check(preds3, targets3, 1e-4, target_block_bytes=40960)            # split + mask
    check(preds3, targets3, 1e-4, target_block_bytes=40960, nsplit=1)  # k accumulation

    # Ragged + masking + split together.
    preds4 = jax.random.normal(ks[6], (2, 3, 65, 65), dtype=jnp.float32)
    targets4 = jax.random.bernoulli(ks[7], p=0.5, shape=(2, 3, 65, 65)).astype(jnp.float32)
    check(preds4, targets4, 1e-4)

    # Opt-in reduced-precision streaming path.
    check(preds3, targets3, 5e-3, stream_dtype=jnp.bfloat16)

    print("KERNEL_OK")
</pallas_src>

<mosaic_0001>
module attributes {stable_mosaic.version = 11 : i64} {
  func.func @_dice_kernel(%arg0: i32, %arg1: i32, %arg2: i32, %arg3: memref<1x1x8x128xf32, #tpu.memory_space<vmem>>, %arg4: memref<1x1x8x128xf32, #tpu.memory_space<vmem>>, %arg5: memref<1x1x8x128xf32, #tpu.memory_space<vmem>>, %arg6: memref<1x1x8x128xf32, #tpu.memory_space<vmem>>, %arg7: memref<1x1x8x128xf32, #tpu.memory_space<vmem>>) attributes {dimension_semantics = [#tpu.dimension_semantics<parallel>, #tpu.dimension_semantics<parallel>, #tpu.dimension_semantics<arbitrary>], iteration_bounds = array<i64: 2, 1, 1>, scalar_prefetch = 0 : i64, scratch_operands = 0 : i64, tpu.core_type = #tpu.core_type<tc>, window_params = [{transform_indices = @transform_0, window_bounds = array<i64: 1, 1, 8, 128>}, {transform_indices = @transform_1, window_bounds = array<i64: 1, 1, 8, 128>}, {transform_indices = @transform_2, window_bounds = array<i64: 1, 1, 8, 128>}, {transform_indices = @transform_3, window_bounds = array<i64: 1, 1, 8, 128>}, {transform_indices = @transform_4, window_bounds = array<i64: 1, 1, 8, 128>}]} {
    %c0_i32 = arith.constant 0 : i32
    %0 = arith.cmpi eq, %arg2, %c0_i32 : i32
    %1 = arith.extui %0 : i1 to i32
    %c0_i32_0 = arith.constant 0 : i32
    %2 = arith.cmpi ne, %1, %c0_i32_0 : i32
    scf.if %2 {
      %cst_36 = arith.constant 0.000000e+00 : f32
      %40 = vector.broadcast %cst_36 : f32 to vector<8x128xf32>
      %c0_37 = arith.constant 0 : index
      %c0_38 = arith.constant 0 : index
      %c0_39 = arith.constant 0 : index
      %c0_40 = arith.constant 0 : index
      %41 = vector.load %arg5[%c0_37, %c0_38, %c0_39, %c0_40] : memref<1x1x8x128xf32, #tpu.memory_space<vmem>>, vector<1x1x8x128xf32>
      %42 = vector.shape_cast %41 : vector<1x1x8x128xf32> to vector<8x128xf32>
      %43 = vector.shape_cast %40 : vector<8x128xf32> to vector<1x1x8x128xf32>
      tpu.vector_store %arg5[%c0_37, %c0_38, %c0_39, %c0_40], %43 {strides = array<i32>} : memref<1x1x8x128xf32, #tpu.memory_space<vmem>>, vector<1x1x8x128xf32>,
      %cst_41 = arith.constant 0.000000e+00 : f32
      %44 = vector.broadcast %cst_41 : f32 to vector<8x128xf32>
      %c0_42 = arith.constant 0 : index
      %c0_43 = arith.constant 0 : index
      %c0_44 = arith.constant 0 : index
      %c0_45 = arith.constant 0 : index
      %45 = vector.load %arg6[%c0_42, %c0_43, %c0_44, %c0_45] : memref<1x1x8x128xf32, #tpu.memory_space<vmem>>, vector<1x1x8x128xf32>
      %46 = vector.shape_cast %45 : vector<1x1x8x128xf32> to vector<8x128xf32>
      %47 = vector.shape_cast %44 : vector<8x128xf32> to vector<1x1x8x128xf32>
      tpu.vector_store %arg6[%c0_42, %c0_43, %c0_44, %c0_45], %47 {strides = array<i32>} : memref<1x1x8x128xf32, #tpu.memory_space<vmem>>, vector<1x1x8x128xf32>,
      %cst_46 = arith.constant 0.000000e+00 : f32
      %48 = vector.broadcast %cst_46 : f32 to vector<8x128xf32>
      %c0_47 = arith.constant 0 : index
      %c0_48 = arith.constant 0 : index
      %c0_49 = arith.constant 0 : index
      %c0_50 = arith.constant 0 : index
      %49 = vector.load %arg7[%c0_47, %c0_48, %c0_49, %c0_50] : memref<1x1x8x128xf32, #tpu.memory_space<vmem>>, vector<1x1x8x128xf32>
      %50 = vector.shape_cast %49 : vector<1x1x8x128xf32> to vector<8x128xf32>
      %51 = vector.shape_cast %48 : vector<8x128xf32> to vector<1x1x8x128xf32>
      tpu.vector_store %arg7[%c0_47, %c0_48, %c0_49, %c0_50], %51 {strides = array<i32>} : memref<1x1x8x128xf32, #tpu.memory_space<vmem>>, vector<1x1x8x128xf32>,
    } else {
    }
    %cst = arith.constant 0.000000e+00 : f32
    %3 = vector.broadcast %cst : f32 to vector<8x128xf32>
    %c0_i32_1 = arith.constant 0 : i32
    %c1_i32 = arith.constant 1 : i32
    %4 = arith.muli %c0_i32_1, %c1_i32 : i32
    %5 = tpu.assume_multiple %4, 1 : i32
    %c0 = arith.constant 0 : index
    %6 = arith.index_cast %5 : i32 to index
    %c0_2 = arith.constant 0 : index
    %c0_3 = arith.constant 0 : index
    %7 = vector.load %arg3[%c0, %6, %c0_2, %c0_3] : memref<1x1x8x128xf32, #tpu.memory_space<vmem>>, vector<1x1x8x128xf32>
    %8 = vector.shape_cast %7 : vector<1x1x8x128xf32> to vector<1x8x128xf32>
    %c0_4 = arith.constant 0 : index
    %9 = arith.index_cast %5 : i32 to index
    %c0_5 = arith.constant 0 : index
    %c0_6 = arith.constant 0 : index
    %10 = vector.load %arg4[%c0_4, %9, %c0_5, %c0_6] : memref<1x1x8x128xf32, #tpu.memory_space<vmem>>, vector<1x1x8x128xf32>
    %11 = vector.shape_cast %10 : vector<1x1x8x128xf32> to vector<1x8x128xf32>
    %cst_7 = arith.constant 5.000000e-01 : f32
    %12 = vector.broadcast %cst_7 : f32 to vector<1x8x128xf32>
    %13 = arith.mulf %12, %8 : vector<1x8x128xf32>
    %14 = math.tanh %13 : vector<1x8x128xf32>
    %15 = arith.mulf %14, %11 : vector<1x8x128xf32>
    %cst_8 = arith.constant dense<0.000000e+00> : vector<8x128xf32>
    %16 = vector.multi_reduction <add>, %15, %cst_8 [0] : vector<1x8x128xf32> to vector<8x128xf32>
    %17 = arith.addf %3, %16 : vector<8x128xf32>
    %cst_9 = arith.constant dense<0.000000e+00> : vector<8x128xf32>
    %18 = vector.multi_reduction <add>, %14, %cst_9 [0] : vector<1x8x128xf32> to vector<8x128xf32>
    %19 = arith.addf %3, %18 : vector<8x128xf32>
    %cst_10 = arith.constant dense<0.000000e+00> : vector<8x128xf32>
    %20 = vector.multi_reduction <add>, %11, %cst_10 [0] : vector<1x8x128xf32> to vector<8x128xf32>
    %21 = arith.addf %3, %20 : vector<8x128xf32>
    %c1_i32_11 = arith.constant 1 : i32
    %c0_12 = arith.constant 0 : index
    %c0_13 = arith.constant 0 : index
    %c0_14 = arith.constant 0 : index
    %c0_15 = arith.constant 0 : index
    %22 = vector.load %arg5[%c0_12, %c0_13, %c0_14, %c0_15] : memref<1x1x8x128xf32, #tpu.memory_space<vmem>>, vector<1x1x8x128xf32>
    %23 = vector.shape_cast %22 : vector<1x1x8x128xf32> to vector<8x128xf32>
    %24 = arith.addf %23, %17 : vector<8x128xf32>
    %c0_16 = arith.constant 0 : index
    %c0_17 = arith.constant 0 : index
    %c0_18 = arith.constant 0 : index
    %c0_19 = arith.constant 0 : index
    %25 = vector.load %arg5[%c0_16, %c0_17, %c0_18, %c0_19] : memref<1x1x8x128xf32, #tpu.memory_space<vmem>>, vector<1x1x8x128xf32>
    %26 = vector.shape_cast %25 : vector<1x1x8x128xf32> to vector<8x128xf32>
    %27 = vector.shape_cast %24 : vector<8x128xf32> to vector<1x1x8x128xf32>
    tpu.vector_store %arg5[%c0_16, %c0_17, %c0_18, %c0_19], %27 {strides = array<i32>} : memref<1x1x8x128xf32, #tpu.memory_space<vmem>>, vector<1x1x8x128xf32>,
    %c0_20 = arith.constant 0 : index
    %c0_21 = arith.constant 0 : index
    %c0_22 = arith.constant 0 : index
    %c0_23 = arith.constant 0 : index
    %28 = vector.load %arg6[%c0_20, %c0_21, %c0_22, %c0_23] : memref<1x1x8x128xf32, #tpu.memory_space<vmem>>, vector<1x1x8x128xf32>
    %29 = vector.shape_cast %28 : vector<1x1x8x128xf32> to vector<8x128xf32>
    %30 = arith.addf %29, %19 : vector<8x128xf32>
    %c0_24 = arith.constant 0 : index
    %c0_25 = arith.constant 0 : index
    %c0_26 = arith.constant 0 : index
    %c0_27 = arith.constant 0 : index
    %31 = vector.load %arg6[%c0_24, %c0_25, %c0_26, %c0_27] : memref<1x1x8x128xf32, #tpu.memory_space<vmem>>, vector<1x1x8x128xf32>
    %32 = vector.shape_cast %31 : vector<1x1x8x128xf32> to vector<8x128xf32>
    %33 = vector.shape_cast %30 : vector<8x128xf32> to vector<1x1x8x128xf32>
    tpu.vector_store %arg6[%c0_24, %c0_25, %c0_26, %c0_27], %33 {strides = array<i32>} : memref<1x1x8x128xf32, #tpu.memory_space<vmem>>, vector<1x1x8x128xf32>,
    %c0_28 = arith.constant 0 : index
    %c0_29 = arith.constant 0 : index
    %c0_30 = arith.constant 0 : index
    %c0_31 = arith.constant 0 : index
    %34 = vector.load %arg7[%c0_28, %c0_29, %c0_30, %c0_31] : memref<1x1x8x128xf32, #tpu.memory_space<vmem>>, vector<1x1x8x128xf32>
    %35 = vector.shape_cast %34 : vector<1x1x8x128xf32> to vector<8x128xf32>
    %36 = arith.addf %35, %21 : vector<8x128xf32>
    %c0_32 = arith.constant 0 : index
    %c0_33 = arith.constant 0 : index
    %c0_34 = arith.constant 0 : index
    %c0_35 = arith.constant 0 : index
    %37 = vector.load %arg7[%c0_32, %c0_33, %c0_34, %c0_35] : memref<1x1x8x128xf32, #tpu.memory_space<vmem>>, vector<1x1x8x128xf32>
    %38 = vector.shape_cast %37 : vector<1x1x8x128xf32> to vector<8x128xf32>
    %39 = vector.shape_cast %36 : vector<8x128xf32> to vector<1x1x8x128xf32>
    tpu.vector_store %arg7[%c0_32, %c0_33, %c0_34, %c0_35], %39 {strides = array<i32>} : memref<1x1x8x128xf32, #tpu.memory_space<vmem>>, vector<1x1x8x128xf32>,
    return
  }
  func.func @transform_0(%arg0: i32, %arg1: i32, %arg2: i32) -> (i32, i32, i32, i32) {
    %c1_i32 = arith.constant 1 : i32
    %0 = arith.muli %arg1, %c1_i32 : i32
    %1 = arith.addi %0, %arg2 : i32
    %c0_i32 = arith.constant 0 : i32
    %2 = arith.minsi %1, %c0_i32 : i32
    %c0_i32_0 = arith.constant 0 : i32
    %c0_i32_1 = arith.constant 0 : i32
    %c0_i32_2 = arith.constant 0 : i32
    return %arg0, %2, %c0_i32_0, %c0_i32_1 : i32, i32, i32, i32
  }
  func.func @transform_1(%arg0: i32, %arg1: i32, %arg2: i32) -> (i32, i32, i32, i32) {
    %c1_i32 = arith.constant 1 : i32
    %0 = arith.muli %arg1, %c1_i32 : i32
    %1 = arith.addi %0, %arg2 : i32
    %c0_i32 = arith.constant 0 : i32
    %2 = arith.minsi %1, %c0_i32 : i32
    %c0_i32_0 = arith.constant 0 : i32
    %c0_i32_1 = arith.constant 0 : i32
    %c0_i32_2 = arith.constant 0 : i32
    return %arg0, %2, %c0_i32_0, %c0_i32_1 : i32, i32, i32, i32
  }
  func.func @transform_2(%arg0: i32, %arg1: i32, %arg2: i32) -> (i32, i32, i32, i32) {
    %c0_i32 = arith.constant 0 : i32
    %c0_i32_0 = arith.constant 0 : i32
    %c0_i32_1 = arith.constant 0 : i32
    return %arg0, %arg1, %c0_i32, %c0_i32_0 : i32, i32, i32, i32
  }
  func.func @transform_3(%arg0: i32, %arg1: i32, %arg2: i32) -> (i32, i32, i32, i32) {
    %c0_i32 = arith.constant 0 : i32
    %c0_i32_0 = arith.constant 0 : i32
    %c0_i32_1 = arith.constant 0 : i32
    return %arg0, %arg1, %c0_i32, %c0_i32_0 : i32, i32, i32, i32
  }
  func.func @transform_4(%arg0: i32, %arg1: i32, %arg2: i32) -> (i32, i32, i32, i32) {
    %c0_i32 = arith.constant 0 : i32
    %c0_i32_0 = arith.constant 0 : i32
    %c0_i32_1 = arith.constant 0 : i32
    return %arg0, %arg1, %c0_i32, %c0_i32_0 : i32, i32, i32, i32
  }
}

</mosaic_0001>

<llo_original>
// kernel: dice_loss.1
$region0: #{dice_loss.1}
  #allocation0 [shape = 'u32[]', space=smem, size = 0x4, offset = 0x4, fixed_abs, tag = 'smem constant byte address 0x4 - core index']
  #allocation1 [shape = 'u32[144,128]{1,0:T(1,128)}', space=vmem, size = 0x12000, scoped, tag = 'internal scratch']
  %s0 = inlined_call_operand.vmem [shape: f32[2,1,8,128], index: 0, kind: input, shape index: {}]
  %s1 = inlined_call_operand.vmem [shape: f32[2,1,8,128], index: 1, kind: input, shape index: {}]
  %s2 = inlined_call_operand.vmem [shape: f32[2,1,8,128], index: 2, kind: output, shape index: {0}]
  %s3 = inlined_call_operand.vmem [shape: f32[2,1,8,128], index: 3, kind: output, shape index: {1}]
  %s4 = inlined_call_operand.vmem [shape: f32[2,1,8,128], index: 4, kind: output, shape index: {2}]
  %5 = xla_tuple %s2, %s3, %s4
  %s6 = sld [smem:[#allocation0]]
  $region61: #{dice_loss.1} parent=0
    _
  %s8 = ssub.s32 1, %s6
  %s9 = scalar_select 0, %s8, %s6
  loop: start=0, step=1, limit=4
  $region2: #{dice_loss.1} parent=0 // loop_pre_header
    _
  $region3: #{dice_loss.1} parent=0 // loop_header
    %s11 = sphi 0, %s15
    %p12 = scmp.ge.s32.totalorder %s11, 4
    %s18 = sphi 0, %s37
    %s19 = sphi 0, %s33
    %s20 = sphi 0, %s29
    %s21 = sphi 0, %s18
    %s22 = sphi 0, %s19
    %s23 = sphi 0, %s20
    %s24 = sphi 0, %s21
    %s25 = sphi 0, %s22
    %s26 = sphi 0, %s23
    %s48 = sphi 0, %s50
    %s51 = sphi 0, %s48
    %s52 = sphi 0, %s51
    %s68 = sphi 0, %s52
    %s82 = sphi 0, %s84
    %s85 = sphi 0, %s82
    %s86 = sphi 0, %s85
    %s102 = sphi 0, %s86
    %s110 = sphi 0, %s112
    %s113 = sphi 0, %s110
    %s114 = sphi 0, %s113
    %s130 = sphi 0, %s114
    %s138 = sphi 0, %s140
    %s141 = sphi 0, %s138
    %s142 = sphi 0, %s141
    %s158 = sphi 0, %s142
    %s166 = sphi 0, %s168
    %s169 = sphi 0, %s166
    %s170 = sphi 0, %s169
    %s186 = sphi 0, %s170
  $region4: #{dice_loss.1} parent=0 // loop_header_branch
    %14 = sbr.rel (%p12) target = $region8
  $region5: #{dice_loss.1} parent=0 // loop_body
    %s16 = ssub.s32 %s11, 1
    %s17 = ssub.s32 %s11, 2
    %s27 = sadd.s32 1, %s20
    %p28 = scmp.ge.s32.totalorder %s27, 1
    %s29 = scalar_select %p28, 0, %s27
    %s30 = sadd.s32 1, %s19
    %s31 = scalar_select %p28, %s30, %s19
    %p32 = scmp.ge.s32.totalorder %s31, 1
    %s33 = scalar_select %p32, 0, %s31
    %s34 = sadd.s32 1, %s18
    %s35 = scalar_select %p32, %s34, %s18
    %p36 = scmp.ge.s32.totalorder %s35, 2
    %s37 = scalar_select %p36, 0, %s35
    %s38 = sadd.s32 %s19, %s20
    %p39 = scmp.lt.s32.totalorder %s38, 0
    %s40 = scalar_select %p39, %s38, 0
    %s41 = sadd.s32 %s33, %s29
    %p42 = scmp.lt.s32.totalorder %s41, 0
    %s43 = scalar_select %p42, %s41, 0
    %s44 = ssub.s32 %s18, %s37
    %s45 = ssub.s32 %s40, %s43
    %s46 = sor.u32 %s44, %s45
    %p47 = scmp.eq.s32.totalorder %s46, 0
    %s49 = sadd.s32 %s48, 1
    %s50 = scalar_select %p47, %s48, %s49
    %p53 = pneg %p47
    %p54 = scmp.eq.s32.totalorder %s11, 1
    %p55 = por %p53, %p54
    %p56 = scmp.ne.s32.totalorder %s48, %s51
    %p57 = scmp.eq.s32.totalorder %s11, 0
    %p58 = por %p56, %p57
    %p59 = scmp.ne.s32.totalorder %s48, %s51
    %p60 = scmp.eq.s32.totalorder %s16, 1
    %p61 = por %p59, %p60
    %p62 = scmp.ne.s32.totalorder %s51, %s52
    %p63 = scmp.eq.s32.totalorder %s16, 0
    %p64 = por %p62, %p63
    %p65 = scmp.ne.s32.totalorder %s51, %s52
    %p66 = scmp.eq.s32.totalorder %s17, 1
    %p67 = por %p65, %p66
    %p69 = scmp.ne.s32.totalorder %s52, %s68
    %p70 = scmp.eq.s32.totalorder %s17, 0
    %p71 = por %p69, %p70
    %s72 = sadd.s32 %s19, %s20
    %p73 = scmp.lt.s32.totalorder %s72, 0
    %s74 = scalar_select %p73, %s72, 0
    %s75 = sadd.s32 %s33, %s29
    %p76 = scmp.lt.s32.totalorder %s75, 0
    %s77 = scalar_select %p76, %s75, 0
    %s78 = ssub.s32 %s18, %s37
    %s79 = ssub.s32 %s74, %s77
    %s80 = sor.u32 %s78, %s79
    %p81 = scmp.eq.s32.totalorder %s80, 0
    %s83 = sadd.s32 %s82, 1
    %s84 = scalar_select %p81, %s82, %s83
    %p87 = pneg %p81
    %p88 = scmp.eq.s32.totalorder %s11, 1
    %p89 = por %p87, %p88
    %p90 = scmp.ne.s32.totalorder %s82, %s85
    %p91 = scmp.eq.s32.totalorder %s11, 0
    %p92 = por %p90, %p91
    %p93 = scmp.ne.s32.totalorder %s82, %s85
    %p94 = scmp.eq.s32.totalorder %s16, 1
    %p95 = por %p93, %p94
    %p96 = scmp.ne.s32.totalorder %s85, %s86
    %p97 = scmp.eq.s32.totalorder %s16, 0
    %p98 = por %p96, %p97
    %p99 = scmp.ne.s32.totalorder %s85, %s86
    %p100 = scmp.eq.s32.totalorder %s17, 1
    %p101 = por %p99, %p100
    %p103 = scmp.ne.s32.totalorder %s86, %s102
    %p104 = scmp.eq.s32.totalorder %s17, 0
    %p105 = por %p103, %p104
    %s106 = ssub.s32 %s18, %s37
    %s107 = ssub.s32 %s19, %s33
    %s108 = sor.u32 %s106, %s107
    %p109 = scmp.eq.s32.totalorder %s108, 0
    %s111 = sadd.s32 %s110, 1
    %s112 = scalar_select %p109, %s110, %s111
    %p115 = pneg %p109
    %p116 = scmp.eq.s32.totalorder %s11, 1
    %p117 = por %p115, %p116
    %p118 = scmp.ne.s32.totalorder %s110, %s113
    %p119 = scmp.eq.s32.totalorder %s11, 0
    %p120 = por %p118, %p119
    %p121 = scmp.ne.s32.totalorder %s110, %s113
    %p122 = scmp.eq.s32.totalorder %s16, 1
    %p123 = por %p121, %p122
    %p124 = scmp.ne.s32.totalorder %s113, %s114
    %p125 = scmp.eq.s32.totalorder %s16, 0
    %p126 = por %p124, %p125
    %p127 = scmp.ne.s32.totalorder %s113, %s114
    %p128 = scmp.eq.s32.totalorder %s17, 1
    %p129 = por %p127, %p128
    %p131 = scmp.ne.s32.totalorder %s114, %s130
    %p132 = scmp.eq.s32.totalorder %s17, 0
    %p133 = por %p131, %p132
    %s134 = ssub.s32 %s18, %s37
    %s135 = ssub.s32 %s19, %s33
    %s136 = sor.u32 %s134, %s135
    %p137 = scmp.eq.s32.totalorder %s136, 0
    %s139 = sadd.s32 %s138, 1
    %s140 = scalar_select %p137, %s138, %s139
    %p143 = pneg %p137
    %p144 = scmp.eq.s32.totalorder %s11, 1
    %p145 = por %p143, %p144
    %p146 = scmp.ne.s32.totalorder %s138, %s141
    %p147 = scmp.eq.s32.totalorder %s11, 0
    %p148 = por %p146, %p147
    %p149 = scmp.ne.s32.totalorder %s138, %s141
    %p150 = scmp.eq.s32.totalorder %s16, 1
    %p151 = por %p149, %p150
    %p152 = scmp.ne.s32.totalorder %s141, %s142
    %p153 = scmp.eq.s32.totalorder %s16, 0
    %p154 = por %p152, %p153
    %p155 = scmp.ne.s32.totalorder %s141, %s142
    %p156 = scmp.eq.s32.totalorder %s17, 1
    %p157 = por %p155, %p156
    %p159 = scmp.ne.s32.totalorder %s142, %s158
    %p160 = scmp.eq.s32.totalorder %s17, 0
    %p161 = por %p159, %p160
    %s162 = ssub.s32 %s18, %s37
    %s163 = ssub.s32 %s19, %s33
    %s164 = sor.u32 %s162, %s163
    %p165 = scmp.eq.s32.totalorder %s164, 0
    %s167 = sadd.s32 %s166, 1
    %s168 = scalar_select %p165, %s166, %s167
    %p171 = pneg %p165
    %p172 = scmp.eq.s32.totalorder %s11, 1
    %p173 = por %p171, %p172
    %p174 = scmp.ne.s32.totalorder %s166, %s169
    %p175 = scmp.eq.s32.totalorder %s11, 0
    %p176 = por %p174, %p175
    %p177 = scmp.ne.s32.totalorder %s166, %s169
    %p178 = scmp.eq.s32.totalorder %s16, 1
    %p179 = por %p177, %p178
    %p180 = scmp.ne.s32.totalorder %s169, %s170
    %p181 = scmp.eq.s32.totalorder %s16, 0
    %p182 = por %p180, %p181
    %p183 = scmp.ne.s32.totalorder %s169, %s170
    %p184 = scmp.eq.s32.totalorder %s17, 1
    %p185 = por %p183, %p184
    %p187 = scmp.ne.s32.totalorder %s170, %s186
    %p188 = scmp.eq.s32.totalorder %s17, 0
    %p189 = por %p187, %p188
    %p190 = scmp.le.s32.totalorder 1, %s11
    %p191 = scmp.lt.s32.totalorder %s11, 3
    %p192 = pnand %p190, %p191
    %p193 = pneg %p192
    // Predicated region
    $region9: #{dice_loss.1} parent=5 // pred_check
      _
    $region10: #{dice_loss.1} parent=5 // pred_check_branch
      %195 = sbr.rel (%p192) target = $region12
    $region11: #{dice_loss.1} parent=5 // pred_region
      %s196 = ssub.s32 %s11, 1
    $region12: #{dice_loss.1} parent=5 // pred_fallthru
      _
    %p197 = scmp.lt.s32.totalorder %s11, 2
    // Predicated region
    $region13: #{dice_loss.1} parent=5 // pred_check
      %p198 = pneg %p197
    $region14: #{dice_loss.1} parent=5 // pred_check_branch
      %200 = sbr.rel (%p198) target = $region16
    $region15: #{dice_loss.1} parent=5 // pred_region
      // Predicated region
      $region17: #{dice_loss.1} parent=15 // pred_check
        %p201 = pneg %p58
      $region18: #{dice_loss.1} parent=15 // pred_check_branch
        %203 = sbr.rel (%p201) target = $region20
      $region19: #{dice_loss.1} parent=15 // pred_region
        %s204 = sadd.s32 %s19, %s20
        %p205 = scmp.lt.s32.totalorder %s204, 0
        %s206 = scalar_select %p205, %s204, 0
        %p207 = scmp.lt.s32.totalorder %s18, 1
        %s208 = scalar_select %p207, %s18, 1
        %p209 = scmp.lt.s32.totalorder %s206, 0
        %s210 = scalar_select %p209, %s206, 0
        %s211 = sadd.s32 %s210, %s208
        %s212 = smul.addr %s211, 8
        %s213 = scalar_lea.vmem %s0, %s212
        %s214 = sadd.s32 %s19, %s20
        %p215 = scmp.lt.s32.totalorder %s214, 0
        %s216 = scalar_select %p215, %s214, 0
      $region20: #{dice_loss.1} parent=15 // pred_fallthru
        _
      // Predicated region
      $region21: #{dice_loss.1} parent=15 // pred_check
        %p217 = pneg %p92
      $region22: #{dice_loss.1} parent=15 // pred_check_branch
        %219 = sbr.rel (%p217) target = $region24
      $region23: #{dice_loss.1} parent=15 // pred_region
        %s220 = sadd.s32 %s19, %s20
        %p221 = scmp.lt.s32.totalorder %s220, 0
        %s222 = scalar_select %p221, %s220, 0
        %p223 = scmp.lt.s32.totalorder %s18, 1
        %s224 = scalar_select %p223, %s18, 1
        %p225 = scmp.lt.s32.totalorder %s222, 0
        %s226 = scalar_select %p225, %s222, 0
        %s227 = sadd.s32 %s226, %s224
        %s228 = smul.addr %s227, 8
        %s229 = scalar_lea.vmem %s1, %s228
        %s230 = sadd.s32 %s19, %s20
        %p231 = scmp.lt.s32.totalorder %s230, 0
        %s232 = scalar_select %p231, %s230, 0
      $region24: #{dice_loss.1} parent=15 // pred_fallthru
        _
    $region16: #{dice_loss.1} parent=5 // pred_fallthru
      _
    %p233 = scmp.le.s32.totalorder 1, %s11
    %p234 = scmp.lt.s32.totalorder %s11, 3
    %p235 = pnand %p233, %p234
    %p236 = pneg %p235
    // Predicated region
    $region25: #{dice_loss.1} parent=5 // pred_check
      _
    $region26: #{dice_loss.1} parent=5 // pred_check_branch
      %238 = sbr.rel (%p235) target = $region28
    $region27: #{dice_loss.1} parent=5 // pred_region
      %s239 = ssub.s32 %s11, 1
      %s240 = sadd.s32 %s22, %s23
      %p241 = scmp.lt.s32.totalorder %s240, 0
      %s242 = scalar_select %p241, %s240, 0
      %p243 = scmp.lt.s32.totalorder %s21, 1
      %s244 = scalar_select %p243, %s21, 1
      %p245 = scmp.lt.s32.totalorder %s242, 0
      %s246 = scalar_select %p245, %s242, 0
      %s247 = sadd.s32 %s246, %s244
      %s248 = smul.addr %s247, 8
      %s249 = scalar_lea.vmem %s0, %s248
      %p250 = pneg %p64
      %p251 = pneg %p61
      %s252 = sadd.s32 %s22, %s23
      %p253 = scmp.lt.s32.totalorder %s252, 0
      %s254 = scalar_select %p253, %s252, 0
      %p255 = scmp.lt.s32.totalorder %s21, 1
      %s256 = scalar_select %p255, %s21, 1
      %p257 = scmp.lt.s32.totalorder %s254, 0
      %s258 = scalar_select %p257, %s254, 0
      %s259 = sadd.s32 %s258, %s256
      %s260 = smul.addr %s259, 8
      %s261 = scalar_lea.vmem %s1, %s260
      %p262 = pneg %p98
      %p263 = pneg %p95
      %p264 = pneg %p126
      %p265 = pneg %p123
      %p266 = scmp.lt.s32.totalorder %s21, 1
      %s267 = scalar_select %p266, %s21, 1
      %p268 = scmp.lt.s32.totalorder %s22, 0
      %s269 = scalar_select %p268, %s22, 0
      %s270 = sadd.s32 %s269, %s267
      %s271 = smul.addr %s270, 8
      %s272 = scalar_lea.vmem %s2, %s271
      %p273 = pneg %p154
      %p274 = pneg %p151
      %p275 = scmp.lt.s32.totalorder %s21, 1
      %s276 = scalar_select %p275, %s21, 1
      %p277 = scmp.lt.s32.totalorder %s22, 0
      %s278 = scalar_select %p277, %s22, 0
      %s279 = sadd.s32 %s278, %s276
      %s280 = smul.addr %s279, 8
      %s281 = scalar_lea.vmem %s3, %s280
      %p282 = pneg %p182
      %p283 = pneg %p179
      %p284 = scmp.lt.s32.totalorder %s21, 1
      %s285 = scalar_select %p284, %s21, 1
      %p286 = scmp.lt.s32.totalorder %s22, 0
      %s287 = scalar_select %p286, %s22, 0
      %s288 = sadd.s32 %s287, %s285
      %s289 = smul.addr %s288, 8
      %s290 = scalar_lea.vmem %s4, %s289
      %s291 = sadd.s32 %s22, %s23
      %p292 = scmp.lt.s32.totalorder %s291, 0
      %s293 = scalar_select %p292, %s291, 0
      %p294 = scmp.lt.s32.totalorder %s21, 1
      %s295 = scalar_select %p294, %s21, 1
      %p296 = scmp.lt.s32.totalorder %s293, 0
      %s297 = scalar_select %p296, %s293, 0
      %s298 = sadd.s32 %s297, %s295
      %s299 = smul.addr %s298, 8
      %s300 = scalar_lea.vmem %s0, %s299
      %s301 = sadd.s32 %s22, %s23
      %p302 = scmp.lt.s32.totalorder %s301, 0
      %s303 = scalar_select %p302, %s301, 0
      %s304 = sadd.s32 %s22, %s23
      %p305 = scmp.lt.s32.totalorder %s304, 0
      %s306 = scalar_select %p305, %s304, 0
      %p307 = scmp.lt.s32.totalorder %s21, 1
      %s308 = scalar_select %p307, %s21, 1
      %p309 = scmp.lt.s32.totalorder %s306, 0
      %s310 = scalar_select %p309, %s306, 0
      %s311 = sadd.s32 %s310, %s308
      %s312 = smul.addr %s311, 8
      %s313 = scalar_lea.vmem %s1, %s312
      %s314 = sadd.s32 %s22, %s23
      %p315 = scmp.lt.s32.totalorder %s314, 0
      %s316 = scalar_select %p315, %s314, 0
      %p317 = scmp.lt.s32.totalorder %s21, 1
      %s318 = scalar_select %p317, %s21, 1
      %p319 = scmp.lt.s32.totalorder %s22, 0
      %s320 = scalar_select %p319, %s22, 0
      %s321 = sadd.s32 %s320, %s318
      %s322 = smul.addr %s321, 8
      %s323 = scalar_lea.vmem %s2, %s322
      %p324 = scmp.lt.s32.totalorder %s21, 1
      %s325 = scalar_select %p324, %s21, 1
      %p326 = scmp.lt.s32.totalorder %s22, 0
      %s327 = scalar_select %p326, %s22, 0
      %s328 = sadd.s32 %s327, %s325
      %s329 = smul.addr %s328, 8
      %s330 = scalar_lea.vmem %s3, %s329
      %p331 = scmp.lt.s32.totalorder %s21, 1
      %s332 = scalar_select %p331, %s21, 1
      %p333 = scmp.lt.s32.totalorder %s22, 0
      %s334 = scalar_select %p333, %s22, 0
      %s335 = sadd.s32 %s334, %s332
      %s336 = smul.addr %s335, 8
      %s337 = scalar_lea.vmem %s4, %s336
      %p338 = scmp.eq.s32.totalorder %s23, 0
      // Predicated region
      $region29: #{dice_loss.1} parent=27 // pred_check
        %p339 = pneg %p338
      $region30: #{dice_loss.1} parent=27 // pred_check_branch
        %341 = sbr.rel (%p339) target = $region32
      $region31: #{dice_loss.1} parent=27 // pred_region
        %342 = vst [vmem:[%s323] sm:$0xff] 0.0
        %343 = vst [vmem:[%s330] sm:$0xff] 0.0
        %344 = vst [vmem:[%s337] sm:$0xff] 0.0
      $region32: #{dice_loss.1} parent=27 // pred_fallthru
        _
      %s345 = smul.u32 0, 8
      %s346 = scalar_lea.vmem %s300, %s345
      %v347 = vld [vmem:[%s346] sm:$0xff]
      %s348 = scalar_lea.vmem %s313, %s345
      %v349 = vld [vmem:[%s348] sm:$0xff]
      %v350 = vmul.f32 %v347, 0.5
      %v351 = vtanh.pop %v350
      %v352 = vmul.f32 %v351, %v349
      %v353 = vadd.f32 %v352, 0.0
      %v354 = vadd.f32 %v353, 0.0
      %v355 = vadd.f32 %v351, 0.0
      %v356 = vadd.f32 %v355, 0.0
      %v357 = vadd.f32 %v349, 0.0
      %v358 = vadd.f32 %v357, 0.0
      %v359 = vld [vmem:[%s323] sm:$0xff]
      %v360 = vadd.f32 %v359, %v354
      %361 = vst [vmem:[%s323] sm:$0xff] %v360
      %v362 = vld [vmem:[%s330] sm:$0xff]
      %v363 = vadd.f32 %v362, %v356
      %364 = vst [vmem:[%s330] sm:$0xff] %v363
      %v365 = vld [vmem:[%s337] sm:$0xff]
      %v366 = vadd.f32 %v365, %v358
      %367 = vst [vmem:[%s337] sm:$0xff] %v366
      %p368 = scmp.lt.s32.totalorder %s21, 1
      %s369 = scalar_select %p368, %s21, 1
      %p370 = scmp.lt.s32.totalorder %s22, 0
      %s371 = scalar_select %p370, %s22, 0
      %s372 = sadd.s32 %s371, %s369
      %s373 = smul.addr %s372, 8
      %s374 = scalar_lea.vmem %s2, %s373
      %p375 = scmp.lt.s32.totalorder %s21, 1
      %s376 = scalar_select %p375, %s21, 1
      %p377 = scmp.lt.s32.totalorder %s22, 0
      %s378 = scalar_select %p377, %s22, 0
      %s379 = sadd.s32 %s378, %s376
      %s380 = smul.addr %s379, 8
      %s381 = scalar_lea.vmem %s3, %s380
      %p382 = scmp.lt.s32.totalorder %s21, 1
      %s383 = scalar_select %p382, %s21, 1
      %p384 = scmp.lt.s32.totalorder %s22, 0
      %s385 = scalar_select %p384, %s22, 0
      %s386 = sadd.s32 %s385, %s383
      %s387 = smul.addr %s386, 8
      %s388 = scalar_lea.vmem %s4, %s387
      // Predicated region
      $region33: #{dice_loss.1} parent=27 // pred_check
        %p389 = pneg %p123
      $region34: #{dice_loss.1} parent=27 // pred_check_branch
        %391 = sbr.rel (%p389) target = $region36
      $region35: #{dice_loss.1} parent=27 // pred_region
        _
      $region36: #{dice_loss.1} parent=27 // pred_fallthru
        _
      // Predicated region
      $region37: #{dice_loss.1} parent=27 // pred_check
        %p392 = pneg %p151
      $region38: #{dice_loss.1} parent=27 // pred_check_branch
        %394 = sbr.rel (%p392) target = $region40
      $region39: #{dice_loss.1} parent=27 // pred_region
        _
      $region40: #{dice_loss.1} parent=27 // pred_fallthru
        _
      // Predicated region
      $region41: #{dice_loss.1} parent=27 // pred_check
        %p395 = pneg %p179
      $region42: #{dice_loss.1} parent=27 // pred_check_branch
        %397 = sbr.rel (%p395) target = $region44
      $region43: #{dice_loss.1} parent=27 // pred_region
        _
      $region44: #{dice_loss.1} parent=27 // pred_fallthru
        _
    $region28: #{dice_loss.1} parent=5 // pred_fallthru
      _
    %p398 = scmp.le.s32.totalorder 2, %s11
    // Predicated region
    $region45: #{dice_loss.1} parent=5 // pred_check
      %p399 = pneg %p398
    $region46: #{dice_loss.1} parent=5 // pred_check_branch
      %401 = sbr.rel (%p399) target = $region48
    $region47: #{dice_loss.1} parent=5 // pred_region
      %s402 = ssub.s32 %s11, 2
      // Predicated region
      $region49: #{dice_loss.1} parent=47 // pred_check
        %p403 = pneg %p129
      $region50: #{dice_loss.1} parent=47 // pred_check_branch
        %405 = sbr.rel (%p403) target = $region52
      $region51: #{dice_loss.1} parent=47 // pred_region
        %p406 = scmp.lt.s32.totalorder %s24, 1
        %s407 = scalar_select %p406, %s24, 1
        %p408 = scmp.lt.s32.totalorder %s25, 0
        %s409 = scalar_select %p408, %s25, 0
        %s410 = sadd.s32 %s409, %s407
        %s411 = smul.addr %s410, 8
        %s412 = scalar_lea.vmem %s2, %s411
      $region52: #{dice_loss.1} parent=47 // pred_fallthru
        _
      // Predicated region
      $region53: #{dice_loss.1} parent=47 // pred_check
        %p413 = pneg %p157
      $region54: #{dice_loss.1} parent=47 // pred_check_branch
        %415 = sbr.rel (%p413) target = $region56
      $region55: #{dice_loss.1} parent=47 // pred_region
        %p416 = scmp.lt.s32.totalorder %s24, 1
        %s417 = scalar_select %p416, %s24, 1
        %p418 = scmp.lt.s32.totalorder %s25, 0
        %s419 = scalar_select %p418, %s25, 0
        %s420 = sadd.s32 %s419, %s417
        %s421 = smul.addr %s420, 8
        %s422 = scalar_lea.vmem %s3, %s421
      $region56: #{dice_loss.1} parent=47 // pred_fallthru
        _
      // Predicated region
      $region57: #{dice_loss.1} parent=47 // pred_check
        %p423 = pneg %p185
      $region58: #{dice_loss.1} parent=47 // pred_check_branch
        %425 = sbr.rel (%p423) target = $region60
      $region59: #{dice_loss.1} parent=47 // pred_region
        %p426 = scmp.lt.s32.totalorder %s24, 1
        %s427 = scalar_select %p426, %s24, 1
        %p428 = scmp.lt.s32.totalorder %s25, 0
        %s429 = scalar_select %p428, %s25, 0
        %s430 = sadd.s32 %s429, %s427
        %s431 = smul.addr %s430, 8
        %s432 = scalar_lea.vmem %s4, %s431
      $region60: #{dice_loss.1} parent=47 // pred_fallthru
        _
    $region48: #{dice_loss.1} parent=5 // pred_fallthru
      _
  $region6: #{dice_loss.1} parent=0 // loop_footer
    %s15 = sadd.s32 1, %s11
  $region7: #{dice_loss.1} parent=0 // loop_footer_branch
    %10 = sbr.rel target = $region3
  $region8: #{dice_loss.1} parent=0 // loop_exit
    _

</llo_original>
